<compile_context>
chip_gen: v5e
topology: v5e:2x2
jax: 0.10.0
libtpu: 0.0.40
codegen_flags: <defaults>
</compile_context>

<pallas_src>
import math

import jax
import jax.numpy as jnp
from jax.experimental import pallas as pl
from jax.experimental.pallas import tpu as pltpu


def bidaf_kernel(c_ref, mask_ref, w_ref, b_ref, s2_ref):
    # c_ref:    (Bt, L, H) VMEM  -- context rows for this batch tile
    # mask_ref: (1, Bt, L) VMEM  -- float mask (1 keep / 0 pad), lane-dense in L
    # w_ref:    (1, H)     VMEM  -- projection weight (c_weight reshaped)
    # b_ref:    (1,)       SMEM  -- bias scalar
    # s2_ref:   (1, Bt, L) VMEM  -- masked softmax over L (lane-dense output)
    c = c_ref[...]                                     # (Bt, L, H)
    h = c_ref.shape[-1]
    w = w_ref[...].reshape(1, 1, h)                    # (1, 1, H)

    # TODO(synk): training-mode dropout on c is not implemented; eval-mode
    # dropout is the identity, which matches the module at inference.

    # s[b, l] = sum_h c[b, l, h] * w[h] + bias
    # VPU broadcast-multiply + XLU lane reduction instead of an N=1 MXU matmul:
    # keeps L on the lane axis so the softmax and the store stay lane-dense.
    s = jnp.sum(c * w, axis=-1).astype(jnp.float32) + b_ref[0]   # (Bt, L)

    # masked softmax over the length axis (dim=1 of the original (B, L, 1)).
    mask = mask_ref[0]                                 # (Bt, L)
    masked = jnp.where(mask > 0, s, -1e30)
    m = jnp.max(masked, axis=-1, keepdims=True)        # (Bt, 1)
    e = jnp.exp(masked - m)                            # (Bt, L)
    denom = jnp.sum(e, axis=-1, keepdims=True)         # (Bt, 1)
    inv = pl.reciprocal(denom, approx=False)           # EUP; exact for tight check
    s2_ref[0] = (e * inv).astype(s2_ref.dtype)


def _pick_batch_tile(B, L, H, itemsize):
    """Largest divisor of B whose (Bt, L, H) block keeps the double-buffered
    input pipeline well inside scoped VMEM (conservative for v7x: 64 MiB
    physical / 32 MiB scoped default), while keeping >= 2 grid steps when
    possible so v7x's two TensorCores both take part of the batch axis."""
    per_row_bytes = L * H * itemsize
    budget = 6 * 1024 * 1024                 # per c-block buffer (Pallas double-buffers)
    max_bt = max(1, budget // per_row_bytes)
    if B >= 2:
        max_bt = min(max_bt, max(1, B // 2))
    bt = 1
    for d in range(1, min(B, max_bt) + 1):
        if B % d == 0:
            bt = d
    return bt


def bert_bidaf_attention(c, c_mask, c_weight, bias):
    """c: (B, L, H); c_mask: (B, L, 1) or (B, L); c_weight: (H, 1); bias: (1,).

    Returns (x, s2): x = c (the module's return value; passed through with no
    HBM copy) and s2 the masked-softmax attention distribution, shape (B, L, 1).
    """
    B, L, H = c.shape
    bt = _pick_batch_tile(B, L, H, c.dtype.itemsize)
    nt = B // bt

    # Lane-dense mask blocks: (num_tiles, Bt, L) with L on the lane axis.
    mask_blocks = c_mask.reshape(nt, bt, L).astype(jnp.float32)
    w_row = c_weight.reshape(1, H)
    bias = bias.reshape(1).astype(jnp.float32)

    s2_blocks = pl.pallas_call(
        bidaf_kernel,
        out_shape=jax.ShapeDtypeStruct((nt, bt, L), jnp.float32),
        grid_spec=pltpu.PrefetchScalarGridSpec(
            num_scalar_prefetch=0,
            grid=(nt,),
            in_specs=[
                pl.BlockSpec((bt, L, H), lambda b: (b, 0, 0)),
                pl.BlockSpec((1, bt, L), lambda b: (b, 0, 0)),
                pl.BlockSpec((1, H), lambda b: (0, 0)),
                pl.BlockSpec(memory_space=pltpu.MemorySpace.SMEM),
            ],
            out_specs=pl.BlockSpec((1, bt, L), lambda b: (b, 0, 0)),
        ),
        compiler_params=pltpu.CompilerParams(
            dimension_semantics=("parallel",),
            vmem_limit_bytes=32 * 1024 * 1024),
    )(c, mask_blocks, w_row, bias)

    # The module returns x = c (eval-mode dropout is identity): return the
    # input array directly instead of re-materializing a (B, L, H) copy in HBM.
    x = c
    s2 = s2_blocks.reshape(B, L, 1)
    return x, s2


def reference(c, c_mask, c_weight, bias):
    s = jnp.einsum("blh,ho->blo", c.astype(jnp.float32),
                   c_weight.astype(jnp.float32)) + bias
    mask = c_mask.reshape(c.shape[0], c.shape[1], 1).astype(jnp.float32)
    masked = mask * s + (1.0 - mask) * (-1e30)
    s2 = jax.nn.softmax(masked, axis=1)
    return c, s2


if __name__ == "__main__":
    B, L, H = 2, 16, 32  # batch, context length, hidden size

    key = jax.random.PRNGKey(0)
    k_c, k_w = jax.random.split(key)

    c = jax.random.normal(k_c, (B, L, H), dtype=jnp.float32)

    # Mask: first batch keeps 12 positions, second keeps 9 (rest are padding).
    lengths = jnp.array([12, 9], dtype=jnp.int32)
    pos = jnp.arange(L)[None, :]                       # (1, L)
    c_mask = (pos < lengths[:, None]).astype(jnp.float32).reshape(B, L, 1)

    # Deterministic xavier_uniform init for c_weight (H, 1); bias zeros.
    bound = math.sqrt(6.0 / (H + 1))
    c_weight = jax.random.uniform(k_w, (H, 1), dtype=jnp.float32,
                                  minval=-bound, maxval=bound)
    bias = jnp.zeros((1,), dtype=jnp.float32)

    x, s2 = bert_bidaf_attention(c, c_mask, c_weight, bias)
    x, s2 = jax.block_until_ready((x, s2))

    x_ref, s2_ref = reference(c, c_mask, c_weight, bias)

    assert x.shape == (B, L, H) and s2.shape == (B, L, 1)
    assert jnp.allclose(x, x_ref, atol=1e-6, rtol=1e-6), "context pass-through mismatch"
    assert jnp.allclose(s2, s2_ref, atol=1e-5, rtol=1e-5), "masked softmax mismatch"
    # softmax over valid positions sums to 1
    assert jnp.allclose(jnp.sum(s2, axis=1), 1.0, atol=1e-5)

    print("KERNEL_OK")
</pallas_src>

<mosaic_0001>
module attributes {stable_mosaic.version = 11 : i64} {
  func.func @bidaf_kernel(%arg0: i32, %arg1: memref<1x16x32xf32, #tpu.memory_space<vmem>>, %arg2: memref<1x1x16xf32, #tpu.memory_space<vmem>>, %arg3: memref<1x32xf32, #tpu.memory_space<vmem>>, %arg4: memref<1xf32, #tpu.memory_space<smem>>, %arg5: memref<1x1x16xf32, #tpu.memory_space<vmem>>) attributes {dimension_semantics = [#tpu.dimension_semantics<parallel>], iteration_bounds = array<i64: 2>, scalar_prefetch = 0 : i64, scratch_operands = 0 : i64, tpu.core_type = #tpu.core_type<tc>, window_params = [{transform_indices = @transform_0, window_bounds = array<i64: 1, 16, 32>}, {transform_indices = @transform_1, window_bounds = array<i64: 1, 1, 16>}, {pipeline_mode = #tpu.pipeline_mode<synchronous>, transform_indices = @transform_2, window_bounds = array<i64: 1, 32>}, {transform_indices = @transform_3, window_bounds = array<i64: 1>}, {transform_indices = @transform_4, window_bounds = array<i64: 1, 1, 16>}]} {
    %c0 = arith.constant 0 : index
    %c0_0 = arith.constant 0 : index
    %c0_1 = arith.constant 0 : index
    %0 = vector.load %arg1[%c0, %c0_0, %c0_1] : memref<1x16x32xf32, #tpu.memory_space<vmem>>, vector<1x16x32xf32>
    %c0_2 = arith.constant 0 : index
    %c0_3 = arith.constant 0 : index
    %1 = vector.load %arg3[%c0_2, %c0_3] : memref<1x32xf32, #tpu.memory_space<vmem>>, vector<1x32xf32>
    %2 = vector.shape_cast %1 : vector<1x32xf32> to vector<1x1x32xf32>
    %3 = vector.broadcast %2 : vector<1x1x32xf32> to vector<1x16x32xf32>
    %4 = arith.mulf %0, %3 : vector<1x16x32xf32>
    %cst = arith.constant dense<0.000000e+00> : vector<1x16xf32>
    %5 = vector.multi_reduction <add>, %4, %cst [2] : vector<1x16x32xf32> to vector<1x16xf32>
    %c0_4 = arith.constant 0 : index
    %6 = memref.load %arg4[%c0_4] : memref<1xf32, #tpu.memory_space<smem>>
    %7 = vector.broadcast %6 : f32 to vector<1x16xf32>
    %8 = arith.addf %5, %7 : vector<1x16xf32>
    %c0_5 = arith.constant 0 : index
    %c0_6 = arith.constant 0 : index
    %c0_7 = arith.constant 0 : index
    %9 = vector.load %arg2[%c0_5, %c0_6, %c0_7] : memref<1x1x16xf32, #tpu.memory_space<vmem>>, vector<1x1x16xf32>
    %10 = vector.shape_cast %9 : vector<1x1x16xf32> to vector<1x16xf32>
    %cst_8 = arith.constant 0.000000e+00 : f32
    %11 = vector.broadcast %cst_8 : f32 to vector<1x16xf32>
    %12 = arith.cmpf ogt, %10, %11 : vector<1x16xf32>
    %cst_9 = arith.constant -1.000000e+30 : f32
    %13 = vector.broadcast %cst_9 : f32 to vector<1x16xf32>
    %14 = arith.select %12, %8, %13 : vector<1x16xi1>, vector<1x16xf32>
    %cst_10 = arith.constant dense<0xFF800000> : vector<1xf32>
    %15 = vector.multi_reduction <maximumf>, %14, %cst_10 [1] : vector<1x16xf32> to vector<1xf32>
    %16 = vector.shape_cast %15 : vector<1xf32> to vector<1x1xf32>
    %17 = vector.broadcast %16 : vector<1x1xf32> to vector<1x16xf32>
    %18 = arith.subf %14, %17 : vector<1x16xf32>
    %19 = math.exp %18 : vector<1x16xf32>
    %cst_11 = arith.constant dense<0.000000e+00> : vector<1xf32>
    %20 = vector.multi_reduction <add>, %19, %cst_11 [1] : vector<1x16xf32> to vector<1xf32>
    %21 = vector.shape_cast %20 : vector<1xf32> to vector<1x1xf32>
    %22 = tpu.reciprocal %21 : vector<1x1xf32> -> vector<1x1xf32>
    %23 = vector.broadcast %22 : vector<1x1xf32> to vector<1x16xf32>
    %24 = arith.mulf %19, %23 : vector<1x16xf32>
    %c0_12 = arith.constant 0 : index
    %c0_13 = arith.constant 0 : index
    %c0_14 = arith.constant 0 : index
    %25 = vector.load %arg5[%c0_12, %c0_13, %c0_14] : memref<1x1x16xf32, #tpu.memory_space<vmem>>, vector<1x1x16xf32>
    %26 = vector.shape_cast %25 : vector<1x1x16xf32> to vector<1x16xf32>
    %27 = vector.shape_cast %24 : vector<1x16xf32> to vector<1x1x16xf32>
    tpu.vector_store %arg5[%c0_12, %c0_13, %c0_14], %27 {strides = array<i32>} : memref<1x1x16xf32, #tpu.memory_space<vmem>>, vector<1x1x16xf32>,
    return
  }
  func.func @transform_0(%arg0: i32) -> (i32, i32, i32) {
    %c0_i32 = arith.constant 0 : i32
    %c0_i32_0 = arith.constant 0 : i32
    %c0_i32_1 = arith.constant 0 : i32
    return %arg0, %c0_i32, %c0_i32_0 : i32, i32, i32
  }
  func.func @transform_1(%arg0: i32) -> (i32, i32, i32) {
    %c0_i32 = arith.constant 0 : i32
    %c0_i32_0 = arith.constant 0 : i32
    %c0_i32_1 = arith.constant 0 : i32
    return %arg0, %c0_i32, %c0_i32_0 : i32, i32, i32
  }
  func.func @transform_2(%arg0: i32) -> (i32, i32) {
    %c0_i32 = arith.constant 0 : i32
    %c0_i32_0 = arith.constant 0 : i32
    %c0_i32_1 = arith.constant 0 : i32
    return %c0_i32, %c0_i32_0 : i32, i32
  }
  func.func @transform_3(%arg0: i32) -> i32 {
    %c0_i32 = arith.constant 0 : i32
    %c0_i32_0 = arith.constant 0 : i32
    return %c0_i32 : i32
  }
  func.func @transform_4(%arg0: i32) -> (i32, i32, i32) {
    %c0_i32 = arith.constant 0 : i32
    %c0_i32_0 = arith.constant 0 : i32
    %c0_i32_1 = arith.constant 0 : i32
    return %arg0, %c0_i32, %c0_i32_0 : i32, i32, i32
  }
}

</mosaic_0001>

<llo_original>
// kernel: tpu_custom_call.1
$region0: #{tpu_custom_call.1}
  #allocation0 [shape = 'u32[]', space=smem, size = 0x4, offset = 0x4, fixed_abs, tag = 'smem constant byte address 0x4 - core index']
  #allocation1 [shape = 'u32[72,128]{1,0:T(1,128)}', space=vmem, size = 0x9000, scoped, tag = 'internal scratch']
  #allocation2 [shape = 'f32[1]{0:T(128)S(6)}', space=smem, size = 0x200, scoped, tag = 'scoped memory for tpu_custom_call.1']
  %s0 = inlined_call_operand.hbm [shape: f32[2,16,32], index: 0, kind: input, shape index: {}]
  %s1 = inlined_call_operand.vmem [shape: f32[2,1,16], index: 1, kind: input, shape index: {}]
  %s2 = inlined_call_operand.vmem [shape: f32[1,32], index: 2, kind: input, shape index: {}]
  %s3 = inlined_call_operand.<no memory space> [shape: f32[1], index: 3, kind: input, shape index: {}]
  %s4 = inlined_call_operand.hbm [shape: f32[2,1,16], index: 4, kind: output, shape index: {}]
  %s5 = sld [smem:[#allocation0]]
  $region53: #{tpu_custom_call.1} parent=0
    _
  %s7 = ssub.s32 1, %s5
  %s8 = scalar_select 0, %s7, %s5
  %9 = sst [smem:[#allocation2]] %s3
  $region1: #{tpu_custom_call.1} parent=0
    #allocation3 [shape = 'u8[16384]{0}', space=vmem, size = 0x4000, scoped, tag = 'input window, operand 0']
    #allocation4 [shape = 's32[2]{0}', space=sflag, size = 0x8, scoped, tag = 'scoped memory for tpu_custom_call.1']
    #allocation5 [shape = 's32[2]{0}', space=sflag, size = 0x8, scoped, tag = 'scoped memory for tpu_custom_call.1']
    #allocation6 [shape = 'u8[1024]{0}', space=vmem, size = 0x400, scoped, tag = 'output window, operand 0']
    %10 = vsyncpa [#allocation4], 0
    %s11 = scalar_lea.sflag [#allocation4], 1
    %12 = vsyncpa %s11, 0
    %13 = vsyncpa [#allocation5], 0
    %s14 = scalar_lea.sflag [#allocation5], 1
    %15 = vsyncpa %s14, 0
    loop: start=0, step=1, limit=4
    $region2: #{tpu_custom_call.1} parent=1 // loop_pre_header
      _
    $region3: #{tpu_custom_call.1} parent=1 // loop_header
      %s17 = sphi 0, %s21
      %p18 = scmp.ge.s32.totalorder %s17, 4
      %s27 = sphi 0, %s29
      %s30 = sphi 0, %s27
      %s31 = sphi 0, %s30
      %s47 = sphi 0, %s31
      %s53 = sphi 0, %s55
      %s56 = sphi 0, %s53
      %s57 = sphi 0, %s56
      %s73 = sphi 0, %s57
      %s77 = sphi 0, %s77
      %s79 = sphi 0, %s77
      %s80 = sphi 0, %s79
      %s94 = sphi 0, %s80
      %s98 = sphi 0, %s98
      %s100 = sphi 0, %s98
      %s101 = sphi 0, %s100
      %s115 = sphi 0, %s101
      %s121 = sphi 0, %s123
      %s124 = sphi 0, %s121
      %s125 = sphi 0, %s124
      %s141 = sphi 0, %s125
    $region4: #{tpu_custom_call.1} parent=1 // loop_header_branch
      %20 = sbr.rel (%p18) target = $region8
    $region5: #{tpu_custom_call.1} parent=1 // loop_body
      %s22 = ssub.s32 %s17, 1
      %s23 = ssub.s32 %s17, 2
      %s24 = sadd.s32 %s17, 1
      %s25 = ssub.s32 %s17, %s24
      %p26 = scmp.eq.s32.totalorder %s25, 0
      %s28 = sadd.s32 %s27, 1
      %s29 = scalar_select %p26, %s27, %s28
      %p32 = pneg %p26
      %p33 = scmp.eq.s32.totalorder %s17, 1
      %p34 = por %p32, %p33
      %p35 = scmp.ne.s32.totalorder %s27, %s30
      %p36 = scmp.eq.s32.totalorder %s17, 0
      %p37 = por %p35, %p36
      %p38 = scmp.ne.s32.totalorder %s27, %s30
      %p39 = scmp.eq.s32.totalorder %s22, 1
      %p40 = por %p38, %p39
      %p41 = scmp.ne.s32.totalorder %s30, %s31
      %p42 = scmp.eq.s32.totalorder %s22, 0
      %p43 = por %p41, %p42
      %p44 = scmp.ne.s32.totalorder %s30, %s31
      %p45 = scmp.eq.s32.totalorder %s23, 1
      %p46 = por %p44, %p45
      %p48 = scmp.ne.s32.totalorder %s31, %s47
      %p49 = scmp.eq.s32.totalorder %s23, 0
      %p50 = por %p48, %p49
      %s51 = ssub.s32 %s17, %s24
      %p52 = scmp.eq.s32.totalorder %s51, 0
      %s54 = sadd.s32 %s53, 1
      %s55 = scalar_select %p52, %s53, %s54
      %p58 = pneg %p52
      %p59 = scmp.eq.s32.totalorder %s17, 1
      %p60 = por %p58, %p59
      %p61 = scmp.ne.s32.totalorder %s53, %s56
      %p62 = scmp.eq.s32.totalorder %s17, 0
      %p63 = por %p61, %p62
      %p64 = scmp.ne.s32.totalorder %s53, %s56
      %p65 = scmp.eq.s32.totalorder %s22, 1
      %p66 = por %p64, %p65
      %p67 = scmp.ne.s32.totalorder %s56, %s57
      %p68 = scmp.eq.s32.totalorder %s22, 0
      %p69 = por %p67, %p68
      %p70 = scmp.ne.s32.totalorder %s56, %s57
      %p71 = scmp.eq.s32.totalorder %s23, 1
      %p72 = por %p70, %p71
      %p74 = scmp.ne.s32.totalorder %s57, %s73
      %p75 = scmp.eq.s32.totalorder %s23, 0
      %p76 = por %p74, %p75
      %s78 = sadd.s32 %s77, 1
      %p81 = scmp.eq.s32.totalorder %s17, 1
      %p82 = scmp.ne.s32.totalorder %s77, %s79
      %p83 = scmp.eq.s32.totalorder %s17, 0
      %p84 = por %p82, %p83
      %p85 = scmp.ne.s32.totalorder %s77, %s79
      %p86 = scmp.eq.s32.totalorder %s22, 1
      %p87 = por %p85, %p86
      %p88 = scmp.ne.s32.totalorder %s79, %s80
      %p89 = scmp.eq.s32.totalorder %s22, 0
      %p90 = por %p88, %p89
      %p91 = scmp.ne.s32.totalorder %s79, %s80
      %p92 = scmp.eq.s32.totalorder %s23, 1
      %p93 = por %p91, %p92
      %p95 = scmp.ne.s32.totalorder %s80, %s94
      %p96 = scmp.eq.s32.totalorder %s23, 0
      %p97 = por %p95, %p96
      %s99 = sadd.s32 %s98, 1
      %p102 = scmp.eq.s32.totalorder %s17, 1
      %p103 = scmp.ne.s32.totalorder %s98, %s100
      %p104 = scmp.eq.s32.totalorder %s17, 0
      %p105 = por %p103, %p104
      %p106 = scmp.ne.s32.totalorder %s98, %s100
      %p107 = scmp.eq.s32.totalorder %s22, 1
      %p108 = por %p106, %p107
      %p109 = scmp.ne.s32.totalorder %s100, %s101
      %p110 = scmp.eq.s32.totalorder %s22, 0
      %p111 = por %p109, %p110
      %p112 = scmp.ne.s32.totalorder %s100, %s101
      %p113 = scmp.eq.s32.totalorder %s23, 1
      %p114 = por %p112, %p113
      %p116 = scmp.ne.s32.totalorder %s101, %s115
      %p117 = scmp.eq.s32.totalorder %s23, 0
      %p118 = por %p116, %p117
      %s119 = ssub.s32 %s17, %s24
      %p120 = scmp.eq.s32.totalorder %s119, 0
      %s122 = sadd.s32 %s121, 1
      %s123 = scalar_select %p120, %s121, %s122
      %p126 = pneg %p120
      %p127 = scmp.eq.s32.totalorder %s17, 1
      %p128 = por %p126, %p127
      %p129 = scmp.ne.s32.totalorder %s121, %s124
      %p130 = scmp.eq.s32.totalorder %s17, 0
      %p131 = por %p129, %p130
      %p132 = scmp.ne.s32.totalorder %s121, %s124
      %p133 = scmp.eq.s32.totalorder %s22, 1
      %p134 = por %p132, %p133
      %p135 = scmp.ne.s32.totalorder %s124, %s125
      %p136 = scmp.eq.s32.totalorder %s22, 0
      %p137 = por %p135, %p136
      %p138 = scmp.ne.s32.totalorder %s124, %s125
      %p139 = scmp.eq.s32.totalorder %s23, 1
      %p140 = por %p138, %p139
      %p142 = scmp.ne.s32.totalorder %s125, %s141
      %p143 = scmp.eq.s32.totalorder %s23, 0
      %p144 = por %p142, %p143
      %p145 = scmp.le.s32.totalorder 1, %s17
      %p146 = scmp.lt.s32.totalorder %s17, 3
      %p147 = pnand %p145, %p146
      %p148 = pneg %p147
      // Predicated region
      $region9: #{tpu_custom_call.1} parent=5 // pred_check
        _
      $region10: #{tpu_custom_call.1} parent=5 // pred_check_branch
        %150 = sbr.rel (%p147) target = $region12
      $region11: #{tpu_custom_call.1} parent=5 // pred_region
        %s151 = ssub.s32 %s17, 1
        // Predicated region
        $region13: #{tpu_custom_call.1} parent=11 // pred_check
          %p152 = pneg %p90
        $region14: #{tpu_custom_call.1} parent=11 // pred_check_branch
          %154 = sbr.rel (%p152) target = $region16
        $region15: #{tpu_custom_call.1} parent=11 // pred_region
          _
        $region16: #{tpu_custom_call.1} parent=11 // pred_fallthru
          _
        // Predicated region
        $region17: #{tpu_custom_call.1} parent=11 // pred_check
          %p155 = pneg %p111
        $region18: #{tpu_custom_call.1} parent=11 // pred_check_branch
          %157 = sbr.rel (%p155) target = $region20
        $region19: #{tpu_custom_call.1} parent=11 // pred_region
          _
        $region20: #{tpu_custom_call.1} parent=11 // pred_fallthru
          _
      $region12: #{tpu_custom_call.1} parent=5 // pred_fallthru
        _
      %p158 = scmp.lt.s32.totalorder %s17, 2
      // Predicated region
      $region21: #{tpu_custom_call.1} parent=5 // pred_check
        %p159 = pneg %p158
      $region22: #{tpu_custom_call.1} parent=5 // pred_check_branch
        %161 = sbr.rel (%p159) target = $region24
      $region23: #{tpu_custom_call.1} parent=5 // pred_region
        // Predicated region
        $region25: #{tpu_custom_call.1} parent=23 // pred_check
          %p162 = pneg %p37
        $region26: #{tpu_custom_call.1} parent=23 // pred_check_branch
          %164 = sbr.rel (%p162) target = $region28
        $region27: #{tpu_custom_call.1} parent=23 // pred_region
          %s165 = sand.u32 %s27, 1
          %s166 = scalar_lea.sflag [#allocation4], %s165
          %s167 = sand.u32 %s27, 1
          %s168 = smul.addr %s167, 16
          %s169 = scalar_lea.vmem [#allocation3], %s168
          %171 = vsyncadd %s166, 0
          %s172 = smul.addr %s17, 2
          %s173 = smul.addr %s172, 8
          %s174 = scalar_lea.hbm %s0, %s173
          %s175 = sshll.u32 %s174, 4
          %s176 = int_to_ptr.hbm [resolvable:$true] %s175
          %s177 = sshll.u32 %s169, 4
          %s178 = int_to_ptr.vmem [resolvable:$true] %s177
          %183 = dma.hbm_to_vmem [thread:$0]  %s176, 256, %s178, %s166, 128, 128, 8
        $region28: #{tpu_custom_call.1} parent=23 // pred_fallthru
          _
        // Predicated region
        $region29: #{tpu_custom_call.1} parent=23 // pred_check
          %p184 = pneg %p63
        $region30: #{tpu_custom_call.1} parent=23 // pred_check_branch
          %186 = sbr.rel (%p184) target = $region32
        $region31: #{tpu_custom_call.1} parent=23 // pred_region
          %p187 = scmp.lt.s32.totalorder %s17, 1
          %s188 = scalar_select %p187, %s17, 1
          %s189 = scalar_lea.vmem %s1, %s188
        $region32: #{tpu_custom_call.1} parent=23 // pred_fallthru
          _
      $region24: #{tpu_custom_call.1} parent=5 // pred_fallthru
        _
      %p190 = scmp.le.s32.totalorder 1, %s17
      %p191 = scmp.lt.s32.totalorder %s17, 3
      %p192 = pnand %p190, %p191
      %p193 = pneg %p192
      // Predicated region
      $region33: #{tpu_custom_call.1} parent=5 // pred_check
        _
      $region34: #{tpu_custom_call.1} parent=5 // pred_check_branch
        %195 = sbr.rel (%p192) target = $region36
      $region35: #{tpu_custom_call.1} parent=5 // pred_region
        %s196 = ssub.s32 %s17, 1
        %s197 = sand.u32 %s30, 1
        %s198 = scalar_lea.sflag [#allocation4], %s197
        %s199 = sand.u32 %s30, 1
        %s200 = smul.addr %s199, 16
        %s201 = scalar_lea.vmem [#allocation3], %s200
        // Predicated region
        $region37: #{tpu_custom_call.1} parent=35 // pred_check
          %p202 = pneg %p43
        $region38: #{tpu_custom_call.1} parent=35 // pred_check_branch
          %204 = sbr.rel (%p202) target = $region40
        $region39: #{tpu_custom_call.1} parent=35 // pred_region
          %206 = dma.done %s198, 256
        $region40: #{tpu_custom_call.1} parent=35 // pred_fallthru
          _
        %s207 = sand.u32 %s30, 1
        %s208 = scalar_lea.sflag [#allocation4], %s207
        %s209 = sand.u32 %s30, 1
        %s210 = smul.addr %s209, 16
        %s211 = scalar_lea.vmem [#allocation3], %s210
        %p212 = pneg %p43
        %p213 = pneg %p40
        %p214 = scmp.lt.s32.totalorder %s22, 1
        %s215 = scalar_select %p214, %s22, 1
        %s216 = scalar_lea.vmem %s1, %s215
        %p217 = pneg %p69
        %p218 = pneg %p66
        %p219 = pneg %p90
        %p220 = pneg %p87
        %p221 = pneg %p111
        %p222 = pneg %p108
        %p223 = pneg %p137
        %p224 = pneg %p134
        %s225 = sand.u32 %s124, 1
        %s226 = scalar_lea.sflag [#allocation5], %s225
        %s227 = sand.u32 %s124, 1
        %s228 = scalar_lea.vmem [#allocation6], %s227
        %p229 = scmp.lt.s32.totalorder %s22, 1
        %s230 = scalar_select %p229, %s22, 1
        %s231 = scalar_lea.vmem %s1, %s230
        %v232 = vld [vmem:[%s201] sm:$0xff]
        %v233 = vld [vmem:[%s201 + $0x8] sm:$0xff]
        %v234 = vld [vmem:[%s2] sm:$0x1]
        %v236 = vperm.slane %v234, 0
        %v238 = vmul.f32 %v232, %v236
        %v239 = vmul.f32 %v233, %v236
        %vm240 = vcmask 261120
        %v241 = vsel %vm240, %v238, 0.0
        %242 = vadd.xlane.f32.xlu0 %v241
        %v243 = vpop.xlane.xlu0 %242
        %v244 = vsel %vm240, %v239, 0.0
        %245 = vadd.xlane.f32.xlu0 %v244
        %v246 = vpop.xlane.xlu0 %245
        %s247 = sld [smem:[#allocation2]]
        %v248 = vstv %s247
        %v249 = vadd.f32 %v243, %v248
        %v250 = vadd.f32 %v246, %v248
        %v251 = vld [vmem:[%s231] sm:$0x1]
        %vm252 = vcmp.gt.f32.partialorder %v251, 0.0
        %v255 = vperm.slane %v249, 0
        %v256 = vperm.slane %v249, 1
        %v257 = vperm.slane %v249, 2
        %v258 = vperm.slane %v249, 3
        %v259 = vperm.slane %v249, 4
        %v260 = vperm.slane %v249, 5
        %v261 = vperm.slane %v249, 6
        %v262 = vperm.slane %v249, 7
        %v263 = vperm.slane %v250, 0
        %v264 = vperm.slane %v250, 1
        %v265 = vperm.slane %v250, 2
        %v266 = vperm.slane %v250, 3
        %v267 = vperm.slane %v250, 4
        %v268 = vperm.slane %v250, 5
        %v269 = vperm.slane %v250, 6
        %v270 = vperm.slane %v250, 7
        %271 = vst [vmem:[#allocation1] ss:$9 sm:$0xff] %v255
        %s272 = scalar_lea.vmem [#allocation1], 1
        %273 = vst [vmem:[%s272] ss:$9 sm:$0xff] %v256
        %s274 = scalar_lea.vmem [#allocation1], 2
        %275 = vst [vmem:[%s274] ss:$9 sm:$0xff] %v257
        %s276 = scalar_lea.vmem [#allocation1], 3
        %277 = vst [vmem:[%s276] ss:$9 sm:$0xff] %v258
        %s278 = scalar_lea.vmem [#allocation1], 4
        %279 = vst [vmem:[%s278] ss:$9 sm:$0xff] %v259
        %s280 = scalar_lea.vmem [#allocation1], 5
        %281 = vst [vmem:[%s280] ss:$9 sm:$0xff] %v260
        %s282 = scalar_lea.vmem [#allocation1], 6
        %283 = vst [vmem:[%s282] ss:$9 sm:$0xff] %v261
        %s284 = scalar_lea.vmem [#allocation1], 7
        %285 = vst [vmem:[%s284] ss:$9 sm:$0xff] %v262
        %v286 = vld [vmem:[#allocation1] sm:$0xff]
        %287 = vst [vmem:[#allocation1] ss:$9 sm:$0xff] %v263
        %288 = vst [vmem:[%s272] ss:$9 sm:$0xff] %v264
        %289 = vst [vmem:[%s274] ss:$9 sm:$0xff] %v265
        %290 = vst [vmem:[%s276] ss:$9 sm:$0xff] %v266
        %291 = vst [vmem:[%s278] ss:$9 sm:$0xff] %v267
        %292 = vst [vmem:[%s280] ss:$9 sm:$0xff] %v268
        %293 = vst [vmem:[%s282] ss:$9 sm:$0xff] %v269
        %294 = vst [vmem:[%s284] ss:$9 sm:$0xff] %v270
        %v295 = vld [vmem:[#allocation1] sm:$0xff]
        %296 = vset.pattern.permute.xlu0 0
        %297 = vperm.xlu0 %296, %v286
        %v298 = vpop.permute.xlu0 %297
        %299 = vset.pattern.permute.xlu0 0
        %300 = vperm.xlu0 %299, %v295
        %v301 = vpop.permute.xlu0 %300
        %v302 = vlaneseq
        %v303 = vand.u32 %v302, 127
        %v304 = vperm.slane %v298, %v303
        %v305 = vadd.s32 %v303, 4294967288
        %v306 = vperm.slane %v301, %v305
        %vm307 = vcmask 130112
        %v308 = vsel %vm307, %v306, %v304
        %v310 = vsel %vm252, %v308, -1e+30
        %vm311 = vcmask 122880
        %v312 = vsel %vm311, %v310, -inf
        %313 = vmax.xlane.f32.xlu0 %v312
        %v314 = vpop.xlane.xlu0 %313
        %v315 = vsub.f32 %v310, %v314
        %v316 = vmul.f32 %v315, 1.442695
        %v317 = vpow.pop %v316
        %v318 = vsel %vm311, %v317, 0.0
        %319 = vadd.xlane.f32.xlu0 %v318
        %v320 = vpop.xlane.xlu0 %319
        %v321 = vrcp.pop %v320
        %v322 = vmul.f32 %v320, %v321
        %v323 = vsub.f32 1.0, %v322
        %v324 = vmul.f32 %v321, %v323
        %v325 = vadd.f32 %v321, %v324
        %vm326 = vweird.f32 %v320
        %vm327 = vweird.f32 %v321
        %vm328 = vmor %vm326, %vm327
        %v329 = vsel %vm328, %v321, %v325
        %v330 = vand.u32 2147483647, %v320
        %vm331 = vcmp.eq.f32.partialorder %v330, 8.507059e+37
        %v332 = vand.u32 %v320, 2147483648
        %v333 = vor.u32 1.1754944e-38, %v332
        %v334 = vsel %vm331, %v333, %v329
        %v335 = vmul.f32 %v317, %v334
        %336 = vst.msk [vmem:[%s228] sm:$0x1] %vm311, %v335
        %s337 = sand.u32 %s124, 1
        %s338 = scalar_lea.sflag [#allocation5], %s337
        %s339 = sand.u32 %s124, 1
        %s340 = scalar_lea.vmem [#allocation6], %s339
        // Predicated region
        $region41: #{tpu_custom_call.1} parent=35 // pred_check
          %p341 = pneg %p134
        $region42: #{tpu_custom_call.1} parent=35 // pred_check_branch
          %343 = sbr.rel (%p341) target = $region44
        $region43: #{tpu_custom_call.1} parent=35 // pred_region
          %345 = vsyncadd %s338, 0
          %s346 = scalar_lea.hbm %s4, %s22
          %s348 = sshll.u32 %s340, 4
          %s349 = int_to_ptr.vmem [resolvable:$true] %s348
          %s350 = sshll.u32 %s346, 4
          %s351 = int_to_ptr.hbm [resolvable:$true] %s350
          %353 = dma.vmem_to_hbm [thread:$0]  %s349, 16, %s351, %s338
        $region44: #{tpu_custom_call.1} parent=35 // pred_fallthru
          _
      $region36: #{tpu_custom_call.1} parent=5 // pred_fallthru
        _
      %p354 = scmp.le.s32.totalorder 2, %s17
      // Predicated region
      $region45: #{tpu_custom_call.1} parent=5 // pred_check
        %p355 = pneg %p354
      $region46: #{tpu_custom_call.1} parent=5 // pred_check_branch
        %357 = sbr.rel (%p355) target = $region48
      $region47: #{tpu_custom_call.1} parent=5 // pred_region
        %s358 = ssub.s32 %s17, 2
        // Predicated region
        $region49: #{tpu_custom_call.1} parent=47 // pred_check
          %p359 = pneg %p140
        $region50: #{tpu_custom_call.1} parent=47 // pred_check_branch
          %361 = sbr.rel (%p359) target = $region52
        $region51: #{tpu_custom_call.1} parent=47 // pred_region
          %s362 = sand.u32 %s125, 1
          %s363 = scalar_lea.sflag [#allocation5], %s362
          %s364 = sand.u32 %s125, 1
          %s365 = scalar_lea.vmem [#allocation6], %s364
          %367 = dma.done %s363, 16
        $region52: #{tpu_custom_call.1} parent=47 // pred_fallthru
          _
      $region48: #{tpu_custom_call.1} parent=5 // pred_fallthru
        _
    $region6: #{tpu_custom_call.1} parent=1 // loop_footer
      %s21 = sadd.s32 1, %s17
    $region7: #{tpu_custom_call.1} parent=1 // loop_footer_branch
      %16 = sbr.rel target = $region3
    $region8: #{tpu_custom_call.1} parent=1 // loop_exit
      _
    %368 = vsyncpa [#allocation4], 1
    %s369 = scalar_lea.sflag [#allocation4], 1
    %370 = vsyncpa %s369, 1
    %371 = vsyncpa [#allocation5], 1
    %s372 = scalar_lea.sflag [#allocation5], 1
    %373 = vsyncpa %s372, 1

</llo_original>
